<compile_context>
chip_gen: v7x
topology: tpu7x:2x2x1
jax: 0.10.0
libtpu: 0.0.40
codegen_flags: <defaults>
</compile_context>

<pallas_src>
import functools
import math

import jax
import jax.numpy as jnp
from jax.experimental import pallas as pl
from jax.experimental.pallas import tpu as pltpu

_TWO_PI = 2.0 * math.pi


def _gfp_kernel_aligned(x_ref, w_ref, o_ref, *, log: bool, flip_sin_to_cos: bool, E: int):
    """E % 128 == 0: exact sin/cos written into the two lane-aligned output halves."""
    x = x_ref[...]                       # (tb, 1) f32
    if log:
        x = jnp.log(x)
    proj = x * w_ref[...]                # (tb, E); w_ref already carries the 2*pi factor
    s = jnp.sin(proj)
    c = jnp.cos(proj)
    if flip_sin_to_cos:
        o_ref[:, :E] = c
        o_ref[:, E:] = s
    else:
        o_ref[:, :E] = s
        o_ref[:, E:] = c


def _gfp_kernel_fused(x_ref, w_ref, o_ref, *, log: bool):
    """General E: single lane-dense full-block store.

    w_ref is (2, 2E): row 0 = [w | w] * 2*pi, row 1 = phase ([0 | pi/2] or flipped),
    using cos(t) == sin(t + pi/2) so there is exactly one store and no column split
    at a non-lane-aligned offset.
    """
    x = x_ref[...]                       # (tb, 1) f32
    if log:
        x = jnp.log(x)
    o_ref[...] = jnp.sin(x * w_ref[0:1, :] + w_ref[1:2, :])


def gaussian_fourier_projection(x, weight, *, log=True, flip_sin_to_cos=False,
                                block_b=2048, force_pallas=False):
    """x: (B,) -> (B, 2E) Gaussian Fourier embedding, matching the PyTorch module."""
    B = x.shape[0]
    E = weight.shape[0]
    x = x.astype(jnp.float32)
    w = weight.astype(jnp.float32)

    # Small-problem fast path: launch overhead dominates at typical diffusion timestep
    # sizes and XLA can fuse the whole expression into the consumer (timestep MLP).
    if not force_pallas and B * 2 * E * 4 < (256 << 10):
        return gaussian_fourier_projection_ref(x, w, log=log,
                                               flip_sin_to_cos=flip_sin_to_cos)

    # ---- choose the B tile ----
    # tb must be a multiple of 8 (or the full B) per the (8, 128) layout rule.
    # Cap so the output block stays <= ~2 MiB per buffer (total VMEM ~10-14 MiB for
    # any E), and force >= 2 grid steps once B >= 16 so the "parallel" axis can be
    # sharded across both v7x TensorCores.
    row_bytes = 2 * E * 4
    tb_vmem = max(8, ((2 << 20) // row_bytes) // 8 * 8)
    if B >= 16:
        tb = min(block_b, tb_vmem, max(8, (B // 2) // 8 * 8))
    else:
        tb = B                                       # single full-extent block
    grid_b = pl.cdiv(B, tb)                          # partial last block clipped by Pallas

    x2 = x.reshape(B, 1)
    # NOTE: the (tb, 1) x block lane-pads to (tb, 128) in VMEM (~1 MiB at tb=2048);
    # this is budgeted in vmem_limit_bytes and off the critical (EUP) path.

    if E % 128 == 0:
        w_arr = (w * _TWO_PI).reshape(1, E)
        w_spec = pl.BlockSpec((1, E), lambda i: (0, 0))
        kernel = functools.partial(_gfp_kernel_aligned, log=log,
                                   flip_sin_to_cos=flip_sin_to_cos, E=E)
    else:
        ew = jnp.concatenate([w, w], axis=0) * _TWO_PI             # (2E,)
        half_pi = jnp.full((E,), math.pi / 2.0, jnp.float32)
        zeros = jnp.zeros((E,), jnp.float32)
        phase = (jnp.concatenate([half_pi, zeros], axis=0) if flip_sin_to_cos
                 else jnp.concatenate([zeros, half_pi], axis=0))   # (2E,)
        w_arr = jnp.stack([ew, phase], axis=0)                     # (2, 2E)
        w_spec = pl.BlockSpec((2, 2 * E), lambda i: (0, 0))
        kernel = functools.partial(_gfp_kernel_fused, log=log)

    out = pl.pallas_call(
        kernel,
        out_shape=jax.ShapeDtypeStruct((B, 2 * E), jnp.float32),
        grid_spec=pltpu.PrefetchScalarGridSpec(
            num_scalar_prefetch=0,
            grid=(grid_b,),
            in_specs=[
                pl.BlockSpec((tb, 1), lambda i: (i, 0)),           # x tile, marches over B
                w_spec,                                            # weight rows, resident
            ],
            out_specs=pl.BlockSpec((tb, 2 * E), lambda i: (i, 0)),
        ),
        compiler_params=pltpu.CompilerParams(
            dimension_semantics=("parallel",),                     # shard B across v7x TCs
            vmem_limit_bytes=32 << 20,                             # above v5e's 16 MiB scoped default
        ),
    )(x2, w_arr)
    return out


def gaussian_fourier_projection_ref(x, weight, *, log=True, flip_sin_to_cos=False):
    """Pure-JAX mirror of the PyTorch forward."""
    x = x.astype(jnp.float32)
    if log:
        x = jnp.log(x)
    proj = x[:, None] * weight[None, :].astype(jnp.float32) * 2.0 * math.pi
    if flip_sin_to_cos:
        return jnp.concatenate([jnp.cos(proj), jnp.sin(proj)], axis=-1)
    return jnp.concatenate([jnp.sin(proj), jnp.cos(proj)], axis=-1)


if __name__ == "__main__":
    key = jax.random.PRNGKey(0)
    k_w, k_w2, k_x, k_x2, k_x3 = jax.random.split(key, 5)

    E = 128
    scale = 1.0
    B = 8

    # Deterministic "parameter": weight = randn(E) * scale; noise levels positive (log).
    weight = jax.random.normal(k_w, (E,), dtype=jnp.float32) * scale
    x = jax.random.uniform(k_x, (B,), dtype=jnp.float32, minval=0.1, maxval=10.0)

    def check(out, ref, shape):
        assert out.shape == shape, (out.shape, shape)
        err = float(jnp.max(jnp.abs(out - ref)))
        assert err < 1e-4, err

    # 1) default config (log=True, sin|cos), single tile, lane-aligned E
    out = jax.block_until_ready(
        gaussian_fourier_projection(x, weight, log=True, flip_sin_to_cos=False,
                                    force_pallas=True))
    check(out, gaussian_fourier_projection_ref(x, weight, log=True, flip_sin_to_cos=False),
          (B, 2 * E))

    # 2) flip_sin_to_cos variant (cos|sin)
    out_f = jax.block_until_ready(
        gaussian_fourier_projection(x, weight, log=True, flip_sin_to_cos=True,
                                    force_pallas=True))
    check(out_f, gaussian_fourier_projection_ref(x, weight, log=True, flip_sin_to_cos=True),
          (B, 2 * E))

    # 3) multi-tile path: B=20, tb=8 -> grid of 3 with a clipped partial last block
    B2 = 20
    x_big = jax.random.uniform(k_x2, (B2,), dtype=jnp.float32, minval=0.1, maxval=2.0)
    out_big = jax.block_until_ready(
        gaussian_fourier_projection(x_big, weight, log=False, flip_sin_to_cos=False,
                                    force_pallas=True))
    check(out_big,
          gaussian_fourier_projection_ref(x_big, weight, log=False, flip_sin_to_cos=False),
          (B2, 2 * E))

    # 4) non-lane-aligned embedding size -> fused single-store (phase-trick) path
    E2 = 96
    weight2 = jax.random.normal(k_w2, (E2,), dtype=jnp.float32) * scale
    x_mid = jax.random.uniform(k_x3, (B2,), dtype=jnp.float32, minval=0.1, maxval=10.0)
    out_u = jax.block_until_ready(
        gaussian_fourier_projection(x_mid, weight2, log=True, flip_sin_to_cos=False,
                                    force_pallas=True))
    check(out_u,
          gaussian_fourier_projection_ref(x_mid, weight2, log=True, flip_sin_to_cos=False),
          (B2, 2 * E2))

    # 5) small-problem fast path (bypasses pallas_call so XLA can fuse it)
    out_small = jax.block_until_ready(
        gaussian_fourier_projection(x, weight, log=True, flip_sin_to_cos=False))
    check(out_small,
          gaussian_fourier_projection_ref(x, weight, log=True, flip_sin_to_cos=False),
          (B, 2 * E))

    print("KERNEL_OK")
</pallas_src>

<mosaic_0001>
module attributes {stable_mosaic.version = 11 : i64} {
  func.func @_gfp_kernel_aligned(%arg0: i32, %arg1: memref<8x1xf32, #tpu.memory_space<vmem>>, %arg2: memref<1x128xf32, #tpu.memory_space<vmem>>, %arg3: memref<8x256xf32, #tpu.memory_space<vmem>>) attributes {dimension_semantics = [#tpu.dimension_semantics<parallel>], iteration_bounds = array<i64: 1>, scalar_prefetch = 0 : i64, scratch_operands = 0 : i64, tpu.core_type = #tpu.core_type<tc>, window_params = [{transform_indices = @transform_0, window_bounds = array<i64: 8, 1>}, {pipeline_mode = #tpu.pipeline_mode<synchronous>, transform_indices = @transform_1, window_bounds = array<i64: 1, 128>}, {transform_indices = @transform_2, window_bounds = array<i64: 8, 256>}]} {
    %c0 = arith.constant 0 : index
    %c0_0 = arith.constant 0 : index
    %0 = vector.load %arg1[%c0, %c0_0] : memref<8x1xf32, #tpu.memory_space<vmem>>, vector<8x1xf32>
    %1 = math.log %0 : vector<8x1xf32>
    %c0_1 = arith.constant 0 : index
    %c0_2 = arith.constant 0 : index
    %2 = vector.load %arg2[%c0_1, %c0_2] : memref<1x128xf32, #tpu.memory_space<vmem>>, vector<1x128xf32>
    %3 = vector.broadcast %1 : vector<8x1xf32> to vector<8x128xf32>
    %4 = vector.broadcast %2 : vector<1x128xf32> to vector<8x128xf32>
    %5 = arith.mulf %3, %4 : vector<8x128xf32>
    %6 = math.sin %5 : vector<8x128xf32>
    %7 = math.cos %5 : vector<8x128xf32>
    %c0_3 = arith.constant 0 : index
    %c0_4 = arith.constant 0 : index
    %8 = vector.load %arg3[%c0_3, %c0_4] : memref<8x256xf32, #tpu.memory_space<vmem>>, vector<8x128xf32>
    tpu.vector_store %arg3[%c0_3, %c0_4], %6 {strides = array<i32>} : memref<8x256xf32, #tpu.memory_space<vmem>>, vector<8x128xf32>,
    %c0_5 = arith.constant 0 : index
    %c128 = arith.constant 128 : index
    %9 = vector.load %arg3[%c0_5, %c128] : memref<8x256xf32, #tpu.memory_space<vmem>>, vector<8x128xf32>
    tpu.vector_store %arg3[%c0_5, %c128], %7 {strides = array<i32>} : memref<8x256xf32, #tpu.memory_space<vmem>>, vector<8x128xf32>,
    return
  }
  func.func @transform_0(%arg0: i32) -> (i32, i32) {
    %c0_i32 = arith.constant 0 : i32
    %c0_i32_0 = arith.constant 0 : i32
    return %arg0, %c0_i32 : i32, i32
  }
  func.func @transform_1(%arg0: i32) -> (i32, i32) {
    %c0_i32 = arith.constant 0 : i32
    %c0_i32_0 = arith.constant 0 : i32
    %c0_i32_1 = arith.constant 0 : i32
    return %c0_i32, %c0_i32_0 : i32, i32
  }
  func.func @transform_2(%arg0: i32) -> (i32, i32) {
    %c0_i32 = arith.constant 0 : i32
    %c0_i32_0 = arith.constant 0 : i32
    return %arg0, %c0_i32 : i32, i32
  }
}

</mosaic_0001>

<llo_original>
// kernel: tpu_custom_call.1
$region0: #{tpu_custom_call.1}
  #allocation0 [shape = 'u32[]', space=smem, size = 0x4, offset = 0x4, fixed_abs, tag = 'smem constant byte address 0x4 - core index']
  #allocation1 [shape = 'u32[144,128]{1,0:T(1,128)}', space=vmem, size = 0x12000, scoped, tag = 'internal scratch']
  %s0 = inlined_call_operand.vmem [shape: f32[8,1], index: 0, kind: input, shape index: {}]
  %s1 = inlined_call_operand.vmem [shape: f32[1,128], index: 1, kind: input, shape index: {}]
  %s2 = inlined_call_operand.hbm [shape: f32[8,256], index: 2, kind: output, shape index: {}]
  %s3 = sld [smem:[#allocation0]]
  $region18: #{tpu_custom_call.1} parent=0
    _
  %s5 = ssub.s32 1, %s3
  %s6 = scalar_select 0, %s5, %s3
  $region1: #{tpu_custom_call.1} parent=0
    #allocation2 [shape = 'u8[8192]{0}', space=vmem, size = 0x2000, scoped, tag = 'output window, operand 0, single buffered']
    #allocation3 [shape = 's32[1]{0}', space=sflag, size = 0x4, scoped, tag = 'scoped memory for tpu_custom_call.1']
    %7 = vsyncpa [#allocation3], 0
    // Predicated region
    $region2: #{tpu_custom_call.1} parent=1 // pred_check
      _
    $region3: #{tpu_custom_call.1} parent=1 // pred_check_branch
      %9 = sbr.rel (0) target = $region5
    $region4: #{tpu_custom_call.1} parent=1 // pred_region
      _
    $region5: #{tpu_custom_call.1} parent=1 // pred_fallthru
      _
    // Predicated region
    $region6: #{tpu_custom_call.1} parent=1 // pred_check
      _
    $region7: #{tpu_custom_call.1} parent=1 // pred_check_branch
      %11 = sbr.rel (0) target = $region9
    $region8: #{tpu_custom_call.1} parent=1 // pred_region
      _
    $region9: #{tpu_custom_call.1} parent=1 // pred_fallthru
      _
    %v12 = vld [vmem:[%s0] sm:$0xff]
    %v13 = vlog2.pop %v12
    %v14 = vmul.f32 %v13, 0.6931472
    %v15 = vld [vmem:[%s1] sm:$0x1]
    %17 = vset.pattern.permute.xlu0 0
    %18 = vperm.xlu0 %17, %v14
    %v19 = vpop.permute.xlu0 %18
    %v22 = vlaneseq
    %v23 = vshrl.u32 %v22, 7
    %v24 = vsub.s32 0, %v23
    %v25 = vrot.slane %v15, %v24
    %v27 = vmul.f32 %v19, %v25
    %v28 = vand.u32 2147483647, %v27
    %vm29 = vcmp.le.f32.partialorder %v28, 0.7853982
    %vm30 = vcmp.lt.s32.totalorder %v27, 0
    %v31 = vand.u32 %v27, 2139095040
    %v32 = vshrl.u32 %v31, 23
    %v33 = vsub.s32 %v32, 127
    %v34 = vand.u32 2147483647, %v27
    %v35 = vand.u32 %v34, 8388607
    %v36 = vor.u32 %v35, 8388608
    %v37 = vsub.s32 0, %v36
    %v38 = vadd.s32 %v33, 1
    %vm39 = vcmp.gt.s32.totalorder %v38, 0
    %v40 = vsel %vm39, %v38, 0
    %v41 = vshrl.u32 %v40, 5
    %v42 = vand.u32 %v40, 31
    %v43 = vsub.s32 32, %v42
    %v44 = vshrl.u32 683565275, %v43
    %v45 = vshll.u32 683565275, %v42
    %v46 = vshrl.u32 2475754826, %v43
    %v47 = vor.u32 %v45, %v46
    %v48 = vshll.u32 2475754826, %v42
    %v49 = vshrl.u32 2131351028, %v43
    %v50 = vor.u32 %v48, %v49
    %v51 = vshll.u32 2131351028, %v42
    %v52 = vshrl.u32 2102212464, %v43
    %v53 = vor.u32 %v51, %v52
    %v54 = vshll.u32 2102212464, %v42
    %v55 = vshrl.u32 920167782, %v43
    %v56 = vor.u32 %v54, %v55
    %v57 = vshll.u32 920167782, %v42
    %v58 = vshrl.u32 1326507024, %v43
    %v59 = vor.u32 %v57, %v58
    %vm60 = vcmp.lt.s32.totalorder %v41, 1
    %vm61 = vcmp.lt.s32.totalorder %v41, 2
    %vm62 = vcmp.lt.s32.totalorder %v41, 3
    %vm63 = vcmp.lt.s32.totalorder %v41, 4
    %v64 = vsel %vm60, %v44, %v47
    %v65 = vsel %vm63, %v53, 2102212464
    %v66 = vsel %vm62, %v50, %v65
    %v67 = vsel %vm61, %v64, %v66
    %v68 = vsel %vm60, %v47, %v50
    %v69 = vsel %vm63, %v56, 920167782
    %v70 = vsel %vm62, %v53, %v69
    %v71 = vsel %vm61, %v68, %v70
    %v72 = vsel %vm60, %v50, %v53
    %v73 = vsel %vm63, %v59, 1326507024
    %v74 = vsel %vm62, %v56, %v73
    %v75 = vsel %vm61, %v72, %v74
    %v76 = vshll.u32 %v36, 8
    %v77 = vmul.u32.u64.compose %v76, %v75
    %v78 = vextract.low.u32 %v77
    %v79 = vextract.high.u32 %v77
    %v80 = vmul.u32.u64.compose %v76, %v71
    %v81 = vextract.low.u32 %v80
    %v82 = vextract.high.u32 %v80
    %v83 = vmul.u32 %v76, %v67
    %v84 = vadd.s32 %v79, %v81
    %vm85 = vc.u32 %v79, %v81
    %v86 = vadd.s32 %v82, 1
    %v87 = vsel %vm85, %v86, %v82
    %v88 = vadd.s32 %v83, %v87
    %v89 = vadd.s32 %v88, 536870912
    %v90 = vshrl.u32 %v89, 30
    %v91 = vshll.u32 %v90, 30
    %v92 = vsub.s32 %v88, %v91
    %vm93 = vcmp.lt.s32.totalorder %v92, 0
    %v94 = vsub.s32 0, %v92
    %v95 = vsel %vm93, %v94, %v92
    %v96 = vclz %v95
    %v97 = vsub.s32 %v96, 2
    %vm98 = vcmp.gt.s32.totalorder 0, %v97
    %v99 = vsel %vm98, 0, %v97
    %v100 = vsub.s32 32, %v99
    %v101 = vshll.u32 %v92, %v99
    %v102 = vshrl.u32 %v84, %v100
    %v103 = vor.u32 %v101, %v102
    %v104 = vsub.s32 4294967266, %v99
    %v105 = vadd.s32 %v104, 127
    %v106 = vshll.u32 %v105, 23
    %v107 = vor.u32 4788187, %v106
    %v108 = vand.u32 2147483647, %v107
    %v110 = vcvt.s32.f32 %v103
    %v111 = vmul.f32 %v110, %v108
    %v112 = vxor.u32 %v111, 2147483648
    %v113 = vsel %vm30, %v112, %v111
    %v114 = vsub.s32 4, %v90
    %v115 = vsel %vm30, %v114, %v90
    %v116 = vsel %vm29, %v27, %v113
    %v117 = vsel %vm29, 0, %v115
    %v118 = vcosq.f32.pop %v116
    %v119 = vsinq.f32.pop %v116
    %vm120 = vweird.f32 %v27
    %v121 = vadd.s32 %v117, 3
    %v122 = vand.u32 %v121, 3
    %vm123 = vcmp.lt.s32.totalorder %v122, 2
    %vm124 = vcmp.eq.s32.totalorder %v122, 0
    %v125 = vxor.u32 %v119, 2147483648
    %v126 = vsel %vm124, %v118, %v125
    %vm127 = vcmp.eq.s32.totalorder %v122, 2
    %v128 = vxor.u32 %v118, 2147483648
    %v129 = vsel %vm127, %v128, %v119
    %v130 = vsel %vm123, %v126, %v129
    %v131 = vsel %vm120, nan, %v130
    %v132 = vand.u32 2147483647, %v27
    %vm133 = vcmp.le.f32.partialorder %v132, 0.7853982
    %vm134 = vcmp.lt.s32.totalorder %v27, 0
    %v135 = vand.u32 %v27, 2139095040
    %v136 = vshrl.u32 %v135, 23
    %v137 = vsub.s32 %v136, 127
    %v138 = vand.u32 2147483647, %v27
    %v139 = vand.u32 %v138, 8388607
    %v140 = vor.u32 %v139, 8388608
    %v141 = vsub.s32 0, %v140
    %v142 = vadd.s32 %v137, 1
    %vm143 = vcmp.gt.s32.totalorder %v142, 0
    %v144 = vsel %vm143, %v142, 0
    %v145 = vshrl.u32 %v144, 5
    %v146 = vand.u32 %v144, 31
    %v147 = vsub.s32 32, %v146
    %v148 = vshrl.u32 683565275, %v147
    %v149 = vshll.u32 683565275, %v146
    %v150 = vshrl.u32 2475754826, %v147
    %v151 = vor.u32 %v149, %v150
    %v152 = vshll.u32 2475754826, %v146
    %v153 = vshrl.u32 2131351028, %v147
    %v154 = vor.u32 %v152, %v153
    %v155 = vshll.u32 2131351028, %v146
    %v156 = vshrl.u32 2102212464, %v147
    %v157 = vor.u32 %v155, %v156
    %v158 = vshll.u32 2102212464, %v146
    %v159 = vshrl.u32 920167782, %v147
    %v160 = vor.u32 %v158, %v159
    %v161 = vshll.u32 920167782, %v146
    %v162 = vshrl.u32 1326507024, %v147
    %v163 = vor.u32 %v161, %v162
    %vm164 = vcmp.lt.s32.totalorder %v145, 1
    %vm165 = vcmp.lt.s32.totalorder %v145, 2
    %vm166 = vcmp.lt.s32.totalorder %v145, 3
    %vm167 = vcmp.lt.s32.totalorder %v145, 4
    %v168 = vsel %vm164, %v148, %v151
    %v169 = vsel %vm167, %v157, 2102212464
    %v170 = vsel %vm166, %v154, %v169
    %v171 = vsel %vm165, %v168, %v170
    %v172 = vsel %vm164, %v151, %v154
    %v173 = vsel %vm167, %v160, 920167782
    %v174 = vsel %vm166, %v157, %v173
    %v175 = vsel %vm165, %v172, %v174
    %v176 = vsel %vm164, %v154, %v157
    %v177 = vsel %vm167, %v163, 1326507024
    %v178 = vsel %vm166, %v160, %v177
    %v179 = vsel %vm165, %v176, %v178
    %v180 = vshll.u32 %v140, 8
    %v181 = vmul.u32.u64.compose %v180, %v179
    %v182 = vextract.low.u32 %v181
    %v183 = vextract.high.u32 %v181
    %v184 = vmul.u32.u64.compose %v180, %v175
    %v185 = vextract.low.u32 %v184
    %v186 = vextract.high.u32 %v184
    %v187 = vmul.u32 %v180, %v171
    %v188 = vadd.s32 %v183, %v185
    %vm189 = vc.u32 %v183, %v185
    %v190 = vadd.s32 %v186, 1
    %v191 = vsel %vm189, %v190, %v186
    %v192 = vadd.s32 %v187, %v191
    %v193 = vadd.s32 %v192, 536870912
    %v194 = vshrl.u32 %v193, 30
    %v195 = vshll.u32 %v194, 30
    %v196 = vsub.s32 %v192, %v195
    %vm197 = vcmp.lt.s32.totalorder %v196, 0
    %v198 = vsub.s32 0, %v196
    %v199 = vsel %vm197, %v198, %v196
    %v200 = vclz %v199
    %v201 = vsub.s32 %v200, 2
    %vm202 = vcmp.gt.s32.totalorder 0, %v201
    %v203 = vsel %vm202, 0, %v201
    %v204 = vsub.s32 32, %v203
    %v205 = vshll.u32 %v196, %v203
    %v206 = vshrl.u32 %v188, %v204
    %v207 = vor.u32 %v205, %v206
    %v208 = vsub.s32 4294967266, %v203
    %v209 = vadd.s32 %v208, 127
    %v210 = vshll.u32 %v209, 23
    %v211 = vor.u32 4788187, %v210
    %v212 = vand.u32 2147483647, %v211
    %v214 = vcvt.s32.f32 %v207
    %v215 = vmul.f32 %v214, %v212
    %v216 = vxor.u32 %v215, 2147483648
    %v217 = vsel %vm134, %v216, %v215
    %v218 = vsub.s32 4, %v194
    %v219 = vsel %vm134, %v218, %v194
    %v220 = vsel %vm133, %v27, %v217
    %v221 = vsel %vm133, 0, %v219
    %v222 = vcosq.f32.pop %v220
    %v223 = vsinq.f32.pop %v220
    %vm224 = vweird.f32 %v27
    %v225 = vand.u32 %v221, 3
    %vm226 = vcmp.lt.s32.totalorder %v225, 2
    %vm227 = vcmp.eq.s32.totalorder %v225, 0
    %v228 = vxor.u32 %v223, 2147483648
    %v229 = vsel %vm227, %v222, %v228
    %vm230 = vcmp.eq.s32.totalorder %v225, 2
    %v231 = vxor.u32 %v222, 2147483648
    %v232 = vsel %vm230, %v231, %v223
    %v233 = vsel %vm226, %v229, %v232
    %v234 = vsel %vm224, nan, %v233
    %235 = vst [vmem:[#allocation2] sm:$0xff] %v131
    %236 = vst [vmem:[#allocation2 + $0x8] sm:$0xff] %v234
    // Predicated region
    $region10: #{tpu_custom_call.1} parent=1 // pred_check
      _
    $region11: #{tpu_custom_call.1} parent=1 // pred_check_branch
      %238 = sbr.rel (0) target = $region13
    $region12: #{tpu_custom_call.1} parent=1 // pred_region
      %s240 = ssub.s32 256, 256
      %241 = vsyncadd [#allocation3], %s240
      %s243 = sshll.u32 [#allocation2], 4
      %s244 = int_to_ptr.vmem [resolvable:$true] %s243
      %246 = dma.vmem_to_hbm [thread:$0]  %s244, 256, %s2, [#allocation3]
    $region13: #{tpu_custom_call.1} parent=1 // pred_fallthru
      _
    // Predicated region
    $region14: #{tpu_custom_call.1} parent=1 // pred_check
      _
    $region15: #{tpu_custom_call.1} parent=1 // pred_check_branch
      %248 = sbr.rel (0) target = $region17
    $region16: #{tpu_custom_call.1} parent=1 // pred_region
      %249 = dma.done [#allocation3], 256
    $region17: #{tpu_custom_call.1} parent=1 // pred_fallthru
      _
    %250 = vsyncpa [#allocation3], 1

</llo_original>
